<compile_context>
chip_gen: v7x
topology: tpu7x:2x2x1
jax: 0.10.0
libtpu: 0.0.40
codegen_flags: <defaults>
</compile_context>

<pallas_src>
import functools

import jax
import jax.numpy as jnp
from jax import lax
from jax.experimental import pallas as pl
from jax.experimental.pallas import tpu as pltpu


def _round_up(x, m):
    return ((x + m - 1) // m) * m


# ---------------- Phase 1: tiled (x @ W.T)*c1*sf + bias*sf --------------------
def _fc_matmul_kernel(x_ref, w_ref, b_ref, s_ref, acc_ref, *, c1, scaling_factor):
    @pl.when(pl.program_id(2) == 0)
    def _():
        acc_ref[...] = jnp.zeros_like(acc_ref)

    # Contract x's feature dim against weights' feature dim: weights stay
    # [out_features, in_features] (no transposed HBM copy in the wrapper).
    acc_ref[...] += lax.dot_general(
        x_ref[...], w_ref[...],
        dimension_numbers=(((1,), (1,)), ((), ())),
        preferred_element_type=jnp.float32)

    @pl.when(pl.program_id(2) == pl.num_programs(2) - 1)
    def _():
        prod = acc_ref[...]
        cs = c1 * scaling_factor          # (prod*c1 + b)*sf == prod*(c1*sf) + b*sf
        if cs != 1.0:
            prod = prod * cs
        b = b_ref[...]                    # (1, tn) broadcast over batch rows
        if scaling_factor != 1.0:
            b = b * scaling_factor
        s_ref[...] = (prod + b).astype(s_ref.dtype)


# ---------------- Phase 2: bootstrapping apply (flag in SMEM) -----------------
def _bootstrap_kernel(flag_ref, s_ref, noise_ref, o_ref):
    # flag_ref: (1,) int32 scalar-prefetch arg; 1 -> global std > threshold.
    scale = jnp.where(flag_ref[0] > 0, jnp.float32(0.01), jnp.float32(0.0))
    o_ref[...] = s_ref[...] + noise_ref[...] * scale


def homomorphic_fc(x, weights, bias, noise, *, c1=1.0, scaling_factor=1.0,
                   noise_threshold=0.001, mxu_dtype=jnp.bfloat16,
                   tm_max=256, tn_max=256, tk_max=512):
    """x: [B, in_f], weights: [out_f, in_f], bias: [out_f], noise: [B, out_f]."""
    B, in_f = x.shape
    out_f, in_f_w = weights.shape
    assert in_f == in_f_w and noise.shape == (B, out_f)

    # Tile sizes: batch tiles multiple of 8 (sublanes), N/K tiles multiple of 128
    # (lanes).  Conservative defaults fit every generation's VMEM budget.
    tm = min(tm_max, _round_up(B, 8))
    tn = min(tn_max, _round_up(out_f, 128))
    tk = min(tk_max, _round_up(in_f, 128))
    M = _round_up(B, tm)
    N = _round_up(out_f, tn)
    K = _round_up(in_f, tk)

    # Zero-pad + cast to the MXU dtype.  In a real deployment weights/bias would be
    # padded & cast once outside the hot path (this is a per-call XLA copy here).
    f32 = jnp.float32
    x_p = jnp.zeros((M, K), mxu_dtype).at[:B, :in_f].set(x.astype(mxu_dtype))
    w_p = jnp.zeros((N, K), mxu_dtype).at[:out_f, :in_f].set(weights.astype(mxu_dtype))
    b_p = jnp.zeros((1, N), f32).at[0, :out_f].set(bias.astype(f32))
    n_p = jnp.zeros((M, N), f32).at[:B, :out_f].set(noise.astype(f32))

    gm, gn, gk = M // tm, N // tn, K // tk

    s_p = pl.pallas_call(
        functools.partial(_fc_matmul_kernel, c1=c1, scaling_factor=scaling_factor),
        out_shape=jax.ShapeDtypeStruct((M, N), f32),
        grid_spec=pltpu.PrefetchScalarGridSpec(
            num_scalar_prefetch=0,
            grid=(gm, gn, gk),
            in_specs=[
                pl.BlockSpec((tm, tk), lambda i, j, k: (i, k)),   # x
                pl.BlockSpec((tn, tk), lambda i, j, k: (j, k)),   # weights [out, in]
                pl.BlockSpec((1, tn), lambda i, j, k: (0, j)),    # bias
            ],
            out_specs=pl.BlockSpec((tm, tn), lambda i, j, k: (i, j)),
            scratch_shapes=[pltpu.VMEM((tm, tn), jnp.float32)]),
        compiler_params=pltpu.CompilerParams(
            dimension_semantics=("parallel", "parallel", "arbitrary")),
    )(x_p, w_p, b_p)

    # Global unbiased std (torch.std, ddof=1) over the VALID region, computed as a
    # one-pass sum / sum-of-squares reduction (review-sanctioned XLA op over s).
    s_valid = s_p[:B, :out_f]
    n_elems = B * out_f
    ssum = jnp.sum(s_valid)
    ssq = jnp.sum(s_valid * s_valid)
    var = (ssq - ssum * ssum / n_elems) / max(n_elems - 1, 1)
    std = jnp.sqrt(jnp.maximum(var, 0.0))
    flag = (std > noise_threshold).astype(jnp.int32).reshape(1)

    out_p = pl.pallas_call(
        _bootstrap_kernel,
        out_shape=jax.ShapeDtypeStruct((M, N), f32),
        grid_spec=pltpu.PrefetchScalarGridSpec(
            num_scalar_prefetch=1,                     # flag -> SMEM
            grid=(gm, gn),
            in_specs=[
                pl.BlockSpec((tm, tn), lambda i, j, flag: (i, j)),   # s
                pl.BlockSpec((tm, tn), lambda i, j, flag: (i, j)),   # noise
            ],
            out_specs=pl.BlockSpec((tm, tn), lambda i, j, flag: (i, j))),
        compiler_params=pltpu.CompilerParams(
            dimension_semantics=("parallel", "parallel")),
    )(flag, s_p, n_p)

    return out_p[:B, :out_f]


def homomorphic_fc_ref(x, weights, bias, noise, *,
                       c1=1.0, scaling_factor=1.0, noise_threshold=0.001):
    prod = (x @ weights.T) * c1
    s = (prod + bias[None, :]) * scaling_factor
    std = jnp.std(s, ddof=1)
    return jnp.where(std > noise_threshold, s + noise * 0.01, s)


if __name__ == "__main__":
    B, in_features, out_features = 8, 32, 16
    scaling_factor, C1 = 1.0, 1.0

    key = jax.random.PRNGKey(0)
    kx, kw, kb, kn = jax.random.split(key, 4)

    # Deterministic "encrypted" input and synthetic parameters
    # (module __init__ uses torch.randn for weights/bias).
    x = jax.random.normal(kx, (B, in_features), dtype=jnp.float32)
    weights = jax.random.normal(kw, (out_features, in_features), dtype=jnp.float32)
    bias = jax.random.normal(kb, (out_features,), dtype=jnp.float32)
    # Bootstrapping noise (torch.randn_like equivalent), drawn deterministically.
    noise = jax.random.normal(kn, (B, out_features), dtype=jnp.float32)

    fc = jax.jit(functools.partial(homomorphic_fc,
                                   c1=C1, scaling_factor=scaling_factor))
    out = jax.block_until_ready(fc(x, weights, bias, noise))
    assert out.shape == (B, out_features)

    # Tight check against a reference that uses the same bf16 input quantization
    # (validates kernel mechanics exactly).
    xq = x.astype(jnp.bfloat16).astype(jnp.float32)
    wq = weights.astype(jnp.bfloat16).astype(jnp.float32)
    ref_q = homomorphic_fc_ref(xq, wq, bias, noise,
                               c1=C1, scaling_factor=scaling_factor)
    assert jnp.allclose(out, ref_q, atol=1e-4, rtol=1e-4), \
        float(jnp.max(jnp.abs(out - ref_q)))

    # Loose sanity check against the full-f32 reference (bf16 MXU rounding only).
    ref_f = homomorphic_fc_ref(x, weights, bias, noise,
                               c1=C1, scaling_factor=scaling_factor)
    assert jnp.allclose(out, ref_f, atol=3e-1, rtol=5e-2)

    print("KERNEL_OK")
</pallas_src>

<mosaic_0001>
module attributes {stable_mosaic.version = 11 : i64} {
  func.func @_fc_matmul_kernel(%arg0: i32, %arg1: i32, %arg2: i32, %arg3: memref<8x128xbf16, #tpu.memory_space<vmem>>, %arg4: memref<128x128xbf16, #tpu.memory_space<vmem>>, %arg5: memref<1x128xf32, #tpu.memory_space<vmem>>, %arg6: memref<8x128xf32, #tpu.memory_space<vmem>>, %arg7: memref<8x128xf32, #tpu.memory_space<vmem>>) attributes {dimension_semantics = [#tpu.dimension_semantics<parallel>, #tpu.dimension_semantics<parallel>, #tpu.dimension_semantics<arbitrary>], iteration_bounds = array<i64: 1, 1, 1>, scalar_prefetch = 0 : i64, scratch_operands = 1 : i64, tpu.core_type = #tpu.core_type<tc>, window_params = [{transform_indices = @transform_0, window_bounds = array<i64: 8, 128>}, {transform_indices = @transform_1, window_bounds = array<i64: 128, 128>}, {transform_indices = @transform_2, window_bounds = array<i64: 1, 128>}, {transform_indices = @transform_3, window_bounds = array<i64: 8, 128>}]} {
    %c0_i32 = arith.constant 0 : i32
    %0 = arith.cmpi eq, %arg2, %c0_i32 : i32
    %1 = arith.extui %0 : i1 to i32
    %c0_i32_0 = arith.constant 0 : i32
    %2 = arith.cmpi ne, %1, %c0_i32_0 : i32
    scf.if %2 {
      %cst_10 = arith.constant 0.000000e+00 : f32
      %12 = vector.broadcast %cst_10 : f32 to vector<8x128xf32>
      %c0_11 = arith.constant 0 : index
      %c0_12 = arith.constant 0 : index
      %13 = vector.load %arg7[%c0_11, %c0_12] : memref<8x128xf32, #tpu.memory_space<vmem>>, vector<8x128xf32>
      tpu.vector_store %arg7[%c0_11, %c0_12], %12 {strides = array<i32>} : memref<8x128xf32, #tpu.memory_space<vmem>>, vector<8x128xf32>,
    } else {
    }
    %c0 = arith.constant 0 : index
    %c0_1 = arith.constant 0 : index
    %3 = vector.load %arg7[%c0, %c0_1] : memref<8x128xf32, #tpu.memory_space<vmem>>, vector<8x128xf32>
    %c0_2 = arith.constant 0 : index
    %c0_3 = arith.constant 0 : index
    %4 = vector.load %arg3[%c0_2, %c0_3] : memref<8x128xbf16, #tpu.memory_space<vmem>>, vector<8x128xbf16>
    %c0_4 = arith.constant 0 : index
    %c0_5 = arith.constant 0 : index
    %5 = vector.load %arg4[%c0_4, %c0_5] : memref<128x128xbf16, #tpu.memory_space<vmem>>, vector<128x128xbf16>
    %cst = arith.constant dense<0.000000e+00> : vector<8x128xf32>
    %6 = tpu.matmul %4, %5, %cst {dimension_numbers = #tpu.dot_dimension_numbers<[1], [1], [0], [0], [0, 0, 1, 0], [], []>} : vector<8x128xbf16>, vector<128x128xbf16>, vector<8x128xf32> -> vector<8x128xf32>
    %7 = arith.addf %3, %6 : vector<8x128xf32>
    %c0_6 = arith.constant 0 : index
    %c0_7 = arith.constant 0 : index
    %8 = vector.load %arg7[%c0_6, %c0_7] : memref<8x128xf32, #tpu.memory_space<vmem>>, vector<8x128xf32>
    tpu.vector_store %arg7[%c0_6, %c0_7], %7 {strides = array<i32>} : memref<8x128xf32, #tpu.memory_space<vmem>>, vector<8x128xf32>,
    %c0_i32_8 = arith.constant 0 : i32
    %9 = arith.cmpi eq, %arg2, %c0_i32_8 : i32
    %10 = arith.extui %9 : i1 to i32
    %c0_i32_9 = arith.constant 0 : i32
    %11 = arith.cmpi ne, %10, %c0_i32_9 : i32
    scf.if %11 {
      %c0_10 = arith.constant 0 : index
      %c0_11 = arith.constant 0 : index
      %12 = vector.load %arg7[%c0_10, %c0_11] : memref<8x128xf32, #tpu.memory_space<vmem>>, vector<8x128xf32>
      %c0_12 = arith.constant 0 : index
      %c0_13 = arith.constant 0 : index
      %13 = vector.load %arg5[%c0_12, %c0_13] : memref<1x128xf32, #tpu.memory_space<vmem>>, vector<1x128xf32>
      %14 = vector.broadcast %13 : vector<1x128xf32> to vector<8x128xf32>
      %15 = arith.addf %12, %14 : vector<8x128xf32>
      %c0_14 = arith.constant 0 : index
      %c0_15 = arith.constant 0 : index
      %16 = vector.load %arg6[%c0_14, %c0_15] : memref<8x128xf32, #tpu.memory_space<vmem>>, vector<8x128xf32>
      tpu.vector_store %arg6[%c0_14, %c0_15], %15 {strides = array<i32>} : memref<8x128xf32, #tpu.memory_space<vmem>>, vector<8x128xf32>,
    } else {
    }
    return
  }
  func.func @transform_0(%arg0: i32, %arg1: i32, %arg2: i32) -> (i32, i32) {
    %c0_i32 = arith.constant 0 : i32
    return %arg0, %arg2 : i32, i32
  }
  func.func @transform_1(%arg0: i32, %arg1: i32, %arg2: i32) -> (i32, i32) {
    %c0_i32 = arith.constant 0 : i32
    return %arg1, %arg2 : i32, i32
  }
  func.func @transform_2(%arg0: i32, %arg1: i32, %arg2: i32) -> (i32, i32) {
    %c0_i32 = arith.constant 0 : i32
    %c0_i32_0 = arith.constant 0 : i32
    return %c0_i32, %arg1 : i32, i32
  }
  func.func @transform_3(%arg0: i32, %arg1: i32, %arg2: i32) -> (i32, i32) {
    %c0_i32 = arith.constant 0 : i32
    return %arg0, %arg1 : i32, i32
  }
}

module attributes {stable_mosaic.version = 11 : i64} {
  func.func @_bootstrap_kernel(%arg0: i32, %arg1: i32, %arg2: memref<1xi32, #tpu.memory_space<smem>>, %arg3: memref<8x128xf32, #tpu.memory_space<vmem>>, %arg4: memref<8x128xf32, #tpu.memory_space<vmem>>, %arg5: memref<8x128xf32, #tpu.memory_space<vmem>>) attributes {dimension_semantics = [#tpu.dimension_semantics<parallel>, #tpu.dimension_semantics<parallel>], iteration_bounds = array<i64: 1, 1>, scalar_prefetch = 1 : i64, scratch_operands = 0 : i64, tpu.core_type = #tpu.core_type<tc>, window_params = [{transform_indices = @transform_0, window_bounds = array<i64: 8, 128>}, {transform_indices = @transform_1, window_bounds = array<i64: 8, 128>}, {transform_indices = @transform_2, window_bounds = array<i64: 8, 128>}]} {
    %c0 = arith.constant 0 : index
    %0 = memref.load %arg2[%c0] : memref<1xi32, #tpu.memory_space<smem>>
    %c0_i32 = arith.constant 0 : i32
    %1 = arith.cmpi sgt, %0, %c0_i32 : i32
    %cst = arith.constant 0.00999999977 : f32
    %cst_0 = arith.constant 0.000000e+00 : f32
    %2 = arith.select %1, %cst, %cst_0 : f32
    %c0_1 = arith.constant 0 : index
    %c0_2 = arith.constant 0 : index
    %3 = vector.load %arg3[%c0_1, %c0_2] : memref<8x128xf32, #tpu.memory_space<vmem>>, vector<8x128xf32>
    %c0_3 = arith.constant 0 : index
    %c0_4 = arith.constant 0 : index
    %4 = vector.load %arg4[%c0_3, %c0_4] : memref<8x128xf32, #tpu.memory_space<vmem>>, vector<8x128xf32>
    %5 = vector.broadcast %2 : f32 to vector<8x128xf32>
    %6 = arith.mulf %4, %5 : vector<8x128xf32>
    %7 = arith.addf %3, %6 : vector<8x128xf32>
    %c0_5 = arith.constant 0 : index
    %c0_6 = arith.constant 0 : index
    %8 = vector.load %arg5[%c0_5, %c0_6] : memref<8x128xf32, #tpu.memory_space<vmem>>, vector<8x128xf32>
    tpu.vector_store %arg5[%c0_5, %c0_6], %7 {strides = array<i32>} : memref<8x128xf32, #tpu.memory_space<vmem>>, vector<8x128xf32>,
    return
  }
  func.func @transform_0(%arg0: i32, %arg1: i32, %arg2: memref<1xi32, #tpu.memory_space<smem>>) -> (i32, i32) {
    %c0_i32 = arith.constant 0 : i32
    return %arg0, %arg1 : i32, i32
  }
  func.func @transform_1(%arg0: i32, %arg1: i32, %arg2: memref<1xi32, #tpu.memory_space<smem>>) -> (i32, i32) {
    %c0_i32 = arith.constant 0 : i32
    return %arg0, %arg1 : i32, i32
  }
  func.func @transform_2(%arg0: i32, %arg1: i32, %arg2: memref<1xi32, #tpu.memory_space<smem>>) -> (i32, i32) {
    %c0_i32 = arith.constant 0 : i32
    return %arg0, %arg1 : i32, i32
  }
}

</mosaic_0001>

<llo_original>
// kernel: homomorphic_fc.3
$region0: #{homomorphic_fc.3}
  #allocation0 [shape = 'u32[]', space=smem, size = 0x4, offset = 0x4, fixed_abs, tag = 'smem constant byte address 0x4 - core index']
  #allocation1 [shape = 'u32[144,128]{1,0:T(1,128)}', space=vmem, size = 0x12000, scoped, tag = 'internal scratch']
  #allocation2 [shape = 's32[1]{0}', space=sflag, size = 0x4, scoped, tag = 'scoped memory for homomorphic_fc.3']
  #allocation3 [shape = 's32[1]{0:T(128)S(6)}', space=smem, size = 0x200, scoped, tag = 'prefetched SMEM operand 0']
  %s0 = inlined_call_operand.<no memory space> [shape: s32[1], index: 0, kind: input, shape index: {}]
  %s1 = inlined_call_operand.vmem [shape: f32[8,128], index: 1, kind: input, shape index: {}]
  %s2 = inlined_call_operand.vmem [shape: f32[8,128], index: 2, kind: input, shape index: {}]
  %s3 = inlined_call_operand.hbm [shape: f32[8,128], index: 3, kind: output, shape index: {}]
  %s4 = sld [smem:[#allocation0]]
  $region18: #{homomorphic_fc.3} parent=0
    _
  %s6 = ssub.s32 1, %s4
  %s7 = scalar_select 0, %s6, %s4
  %8 = sst [smem:[#allocation3]] %s0
  $region1: #{homomorphic_fc.3} parent=0
    #allocation4 [shape = 'u8[4096]{0}', space=vmem, size = 0x1000, scoped, tag = 'output window, operand 0, single buffered']
    #allocation5 [shape = 's32[1]{0}', space=sflag, size = 0x4, scoped, tag = 'scoped memory for homomorphic_fc.3']
    %9 = vsyncpa [#allocation5], 0
    // Predicated region
    $region2: #{homomorphic_fc.3} parent=1 // pred_check
      _
    $region3: #{homomorphic_fc.3} parent=1 // pred_check_branch
      %11 = sbr.rel (0) target = $region5
    $region4: #{homomorphic_fc.3} parent=1 // pred_region
      _
    $region5: #{homomorphic_fc.3} parent=1 // pred_fallthru
      _
    // Predicated region
    $region6: #{homomorphic_fc.3} parent=1 // pred_check
      _
    $region7: #{homomorphic_fc.3} parent=1 // pred_check_branch
      %13 = sbr.rel (0) target = $region9
    $region8: #{homomorphic_fc.3} parent=1 // pred_region
      _
    $region9: #{homomorphic_fc.3} parent=1 // pred_fallthru
      _
    %s14 = sld [smem:[#allocation3]]
    %p15 = scmp.gt.s32.totalorder %s14, 0
    %s16 = scalar_select %p15, 0.01, 0.0
    %v17 = vld [vmem:[%s1] sm:$0xff]
    %v18 = vld [vmem:[%s2] sm:$0xff]
    %v19 = vstv %s16
    %v20 = vmul.f32 %v18, %v19
    %v21 = vadd.f32 %v17, %v20
    %22 = vst [vmem:[#allocation4] sm:$0xff] %v21
    // Predicated region
    $region10: #{homomorphic_fc.3} parent=1 // pred_check
      _
    $region11: #{homomorphic_fc.3} parent=1 // pred_check_branch
      %24 = sbr.rel (0) target = $region13
    $region12: #{homomorphic_fc.3} parent=1 // pred_region
      %s26 = ssub.s32 128, 128
      %27 = vsyncadd [#allocation5], %s26
      %s29 = sshll.u32 [#allocation4], 4
      %s30 = int_to_ptr.vmem [resolvable:$true] %s29
      %32 = dma.vmem_to_hbm [thread:$0]  %s30, 128, %s3, [#allocation5]
    $region13: #{homomorphic_fc.3} parent=1 // pred_fallthru
      _
    // Predicated region
    $region14: #{homomorphic_fc.3} parent=1 // pred_check
      _
    $region15: #{homomorphic_fc.3} parent=1 // pred_check_branch
      %34 = sbr.rel (0) target = $region17
    $region16: #{homomorphic_fc.3} parent=1 // pred_region
      %35 = dma.done [#allocation5], 128
    $region17: #{homomorphic_fc.3} parent=1 // pred_fallthru
      _
    %36 = vsyncpa [#allocation5], 1

// kernel: homomorphic_fc.2
$region0: #{homomorphic_fc.2}
  #allocation0 [shape = 'u32[]', space=smem, size = 0x4, offset = 0x4, fixed_abs, tag = 'smem constant byte address 0x4 - core index']
  #allocation1 [shape = 'u32[144,128]{1,0:T(1,128)}', space=vmem, size = 0x12000, scoped, tag = 'internal scratch']
  #allocation2 [shape = 'f32[8,128]{1,0:T(8,128)}', space=vmem, size = 0x1000, scoped, tag = 'scratch operand']
  %s0 = inlined_call_operand.vmem [shape: bf16[8,128], index: 0, kind: input, shape index: {}]
  %s1 = inlined_call_operand.vmem [shape: bf16[128,128], index: 1, kind: input, shape index: {}]
  %s2 = inlined_call_operand.vmem [shape: f32[1,128], index: 2, kind: input, shape index: {}]
  %s3 = inlined_call_operand.vmem [shape: f32[8,128], index: 3, kind: output, shape index: {}]
  %s4 = sld [smem:[#allocation0]]
  $region30: #{homomorphic_fc.2} parent=0
    _
  %s6 = ssub.s32 1, %s4
  %s7 = scalar_select 0, %s6, %s4
  // Predicated region
  $region2: #{homomorphic_fc.2} parent=0 // pred_check
    _
  $region3: #{homomorphic_fc.2} parent=0 // pred_check_branch
    %9 = sbr.rel (0) target = $region5
  $region4: #{homomorphic_fc.2} parent=0 // pred_region
    _
  $region5: #{homomorphic_fc.2} parent=0 // pred_fallthru
    _
  // Predicated region
  $region6: #{homomorphic_fc.2} parent=0 // pred_check
    _
  $region7: #{homomorphic_fc.2} parent=0 // pred_check_branch
    %11 = sbr.rel (0) target = $region9
  $region8: #{homomorphic_fc.2} parent=0 // pred_region
    _
  $region9: #{homomorphic_fc.2} parent=0 // pred_fallthru
    _
  // Predicated region
  $region10: #{homomorphic_fc.2} parent=0 // pred_check
    _
  $region11: #{homomorphic_fc.2} parent=0 // pred_check_branch
    %13 = sbr.rel (0) target = $region13
  $region12: #{homomorphic_fc.2} parent=0 // pred_region
    _
  $region13: #{homomorphic_fc.2} parent=0 // pred_fallthru
    _
  %p15 = scmp.eq.s32.totalorder 0, 0
  // Predicated region
  $region14: #{homomorphic_fc.2} parent=0 // pred_check
    %p16 = pneg %p15
  $region15: #{homomorphic_fc.2} parent=0 // pred_check_branch
    %18 = sbr.rel (%p16) target = $region17
  $region16: #{homomorphic_fc.2} parent=0 // pred_region
    %19 = vst [vmem:[#allocation2] sm:$0xff] 0.0
  $region17: #{homomorphic_fc.2} parent=0 // pred_fallthru
    _
  %v20 = vld [vmem:[#allocation2] sm:$0xff]
  %v21 = vld [vmem:[%s0] sm:$0xf]
  %v22 = vld [vmem:[%s1] sm:$0xf]
  %v23 = vld [vmem:[%s1 + $0x4] sm:$0xf]
  %v24 = vld [vmem:[%s1 + $0x8] sm:$0xf]
  %v25 = vld [vmem:[%s1 + $0xc] sm:$0xf]
  %v26 = vld [vmem:[%s1 + $0x10] sm:$0xf]
  %v27 = vld [vmem:[%s1 + $0x14] sm:$0xf]
  %v28 = vld [vmem:[%s1 + $0x18] sm:$0xf]
  %v29 = vld [vmem:[%s1 + $0x1c] sm:$0xf]
  %v30 = vld [vmem:[%s1 + $0x20] sm:$0xf]
  %v31 = vld [vmem:[%s1 + $0x24] sm:$0xf]
  %v32 = vld [vmem:[%s1 + $0x28] sm:$0xf]
  %v33 = vld [vmem:[%s1 + $0x2c] sm:$0xf]
  %v34 = vld [vmem:[%s1 + $0x30] sm:$0xf]
  %v35 = vld [vmem:[%s1 + $0x34] sm:$0xf]
  %v36 = vld [vmem:[%s1 + $0x38] sm:$0xf]
  %v37 = vld [vmem:[%s1 + $0x3c] sm:$0xf]
  %v54 = vunpack.c.l.b16 %v22
  %v55 = vunpack.c.l.b16 %v23
  %v56 = vunpack.c.l.b16 %v24
  %v57 = vunpack.c.l.b16 %v25
  %v58 = vunpack.c.l.b16 %v26
  %v59 = vunpack.c.l.b16 %v27
  %v60 = vunpack.c.l.b16 %v28
  %v61 = vunpack.c.l.b16 %v29
  %v62 = vunpack.c.l.b16 %v30
  %v63 = vunpack.c.l.b16 %v31
  %v64 = vunpack.c.l.b16 %v32
  %v65 = vunpack.c.l.b16 %v33
  %v66 = vunpack.c.l.b16 %v34
  %v67 = vunpack.c.l.b16 %v35
  %v68 = vunpack.c.l.b16 %v36
  %v69 = vunpack.c.l.b16 %v37
  %v70 = vpack.c.b16 %v55, %v54
  %v71 = vpack.c.b16 %v57, %v56
  %v72 = vpack.c.b16 %v59, %v58
  %v73 = vpack.c.b16 %v61, %v60
  %v74 = vpack.c.b16 %v63, %v62
  %v75 = vpack.c.b16 %v65, %v64
  %v76 = vpack.c.b16 %v67, %v66
  %v77 = vpack.c.b16 %v69, %v68
  %86 = vmatprep.subr.bf16.mxu0 0
  %87 = vmatpush1.bf16.xpose.msra.mxu0 %v70
  %88 = vmatprep.subr.bf16.mxu0 0
  %89 = vmatpush1.bf16.xpose.msra.mxu0 %v71
  %90 = vmatprep.subr.bf16.mxu0 0
  %91 = vmatpush1.bf16.xpose.msra.mxu0 %v72
  %92 = vmatprep.subr.bf16.mxu0 0
  %93 = vmatpush1.bf16.xpose.msra.mxu0 %v73
  %94 = vmatprep.subr.bf16.mxu0 0
  %95 = vmatpush1.bf16.xpose.msra.mxu0 %v74
  %96 = vmatprep.subr.bf16.mxu0 0
  %97 = vmatpush1.bf16.xpose.msra.mxu0 %v75
  %98 = vmatprep.subr.bf16.mxu0 0
  %99 = vmatpush1.bf16.xpose.msra.mxu0 %v76
  %100 = vmatprep.subr.bf16.mxu0 0
  %101 = vmatpush1.bf16.xpose.msra.mxu0 %v77
  %102 = vmatprep.subr.bf16.mxu0 0
  %103 = vmatpush1.bf16.xpose.msra.mxu0 0
  %104 = vmatprep.subr.bf16.mxu0 0
  %105 = vmatpush1.bf16.xpose.msra.mxu0 0
  %106 = vmatprep.subr.bf16.mxu0 0
  %107 = vmatpush1.bf16.xpose.msra.mxu0 0
  %108 = vmatprep.subr.bf16.mxu0 0
  %109 = vmatpush1.bf16.xpose.msra.mxu0 0
  %110 = vmatprep.subr.bf16.mxu0 0
  %111 = vmatpush1.bf16.xpose.msra.mxu0 0
  %112 = vmatprep.subr.bf16.mxu0 0
  %113 = vmatpush1.bf16.xpose.msra.mxu0 0
  %114 = vmatprep.subr.bf16.mxu0 0
  %115 = vmatpush1.bf16.xpose.msra.mxu0 0
  %116 = vmatprep.subr.bf16.mxu0 0
  %117 = vmatpush1.bf16.xpose.msra.mxu0 0
  %118 = vmatprep.mubr.bf16.mxu0 0
  %119 = vmatmul.mubr.bf16.gmra.mrb[0].mxu0 %v21
  %v120 = vpop.f32.mrb[0].mxu0
  %v121 = vadd.f32 0.0, %v120
  %v122 = vpop.f32.mrb[0].mxu0
  %v123 = vpop.f32.mrb[0].mxu0
  %v124 = vpop.f32.mrb[0].mxu0
  %125 = vdwg.mxu0
  %v126 = vadd.f32 %v20, %v121
  %127 = vst [vmem:[#allocation2] sm:$0xff] %v126
  // Predicated region
  $region18: #{homomorphic_fc.2} parent=0 // pred_check
    %p128 = pneg %p15
  $region19: #{homomorphic_fc.2} parent=0 // pred_check_branch
    %130 = sbr.rel (%p128) target = $region21
  $region20: #{homomorphic_fc.2} parent=0 // pred_region
    %v131 = vld [vmem:[#allocation2] sm:$0xff]
    %v132 = vld [vmem:[%s2] sm:$0x1]
    %v134 = vlaneseq
    %v135 = vshrl.u32 %v134, 7
    %v136 = vsub.s32 0, %v135
    %v137 = vrot.slane %v132, %v136
    %v139 = vadd.f32 %v131, %v137
    %140 = vst [vmem:[%s3] sm:$0xff] %v139
  $region21: #{homomorphic_fc.2} parent=0 // pred_fallthru
    _
  // Predicated region
  $region22: #{homomorphic_fc.2} parent=0 // pred_check
    _
  $region23: #{homomorphic_fc.2} parent=0 // pred_check_branch
    %142 = sbr.rel (0) target = $region25
  $region24: #{homomorphic_fc.2} parent=0 // pred_region
    _
  $region25: #{homomorphic_fc.2} parent=0 // pred_fallthru
    _
  // Predicated region
  $region26: #{homomorphic_fc.2} parent=0 // pred_check
    _
  $region27: #{homomorphic_fc.2} parent=0 // pred_check_branch
    %144 = sbr.rel (0) target = $region29
  $region28: #{homomorphic_fc.2} parent=0 // pred_region
    _
  $region29: #{homomorphic_fc.2} parent=0 // pred_fallthru
    _

</llo_original>
